<compile_context>
chip_gen: v5e
topology: v5e:2x2
jax: 0.10.0
libtpu: 0.0.40
codegen_flags: <defaults>
</compile_context>

<pallas_src>
import functools

import jax
import jax.numpy as jnp
from jax.experimental import pallas as pl
from jax.experimental.pallas import tpu as pltpu


def _round_up(x, m):
    return ((x + m - 1) // m) * m


def _pick_tile(n_tok, tm):
    """Token tile: multiple of 8 sublanes, large for roofline, but keep >=8
    grid steps when possible so both v7x TensorCores get work."""
    tm = max(8, _round_up(min(tm, n_tok), 8))
    cap = max(8, _round_up(pl.cdiv(n_tok, 8), 8))
    return min(tm, cap)


# -----------------------------------------------------------------------------
# Kernels
# -----------------------------------------------------------------------------
def _ln_kernel(x_ref, gamma_ref, beta_ref, o_ref, *, eps):
    """LayerNorm over the last dim of a (tm, D) token tile."""
    x = x_ref[...].astype(jnp.float32)
    mean = jnp.mean(x, axis=-1, keepdims=True)
    xc = x - mean
    var = jnp.mean(xc * xc, axis=-1, keepdims=True)   # biased var (PyTorch LN)
    inv = jax.lax.rsqrt(var + eps)
    y = xc * inv * gamma_ref[...] + beta_ref[...]     # gamma/beta already f32
    o_ref[...] = y.astype(o_ref.dtype)


def _ln_linear_kernel(x_ref, gamma_ref, beta_ref, w_ref, b_ref, o_ref, *, eps):
    """Fused LayerNorm + (D x E) linear (+ bias) on a (tm, D) token tile."""
    x = x_ref[...].astype(jnp.float32)
    mean = jnp.mean(x, axis=-1, keepdims=True)
    xc = x - mean
    var = jnp.mean(xc * xc, axis=-1, keepdims=True)
    inv = jax.lax.rsqrt(var + eps)
    y = xc * inv * gamma_ref[...] + beta_ref[...]
    out = jnp.dot(y, w_ref[...], preferred_element_type=jnp.float32)   # MXU
    out = out + b_ref[...]
    o_ref[...] = out.astype(o_ref.dtype)


# -----------------------------------------------------------------------------
# Wrappers
# -----------------------------------------------------------------------------
def layernorm_pallas(x, gamma, beta, *, eps=1e-5, tm=256):
    """LayerNorm over the last dim of x (any leading dims)."""
    orig_shape = x.shape
    d = orig_shape[-1]
    x2 = x.reshape(-1, d)
    n_tok = x2.shape[0]
    tm = _pick_tile(n_tok, tm)
    n_pad = _round_up(n_tok, tm)
    if n_pad != n_tok:
        x2 = jnp.pad(x2, ((0, n_pad - n_tok), (0, 0)))

    gamma2 = gamma.astype(jnp.float32).reshape(1, d)
    beta2 = beta.astype(jnp.float32).reshape(1, d)

    vmem_bytes = 4 * (4 * tm * d + 2 * d) + (1 << 20)
    vmem_limit = int(min(64 * 1024 * 1024, max(vmem_bytes, 16 * 1024 * 1024)))
    cost = pl.CostEstimate(
        flops=int(7 * n_pad * d),
        transcendentals=int(n_pad),
        bytes_accessed=int(4 * (2 * n_pad * d + 2 * d)),
    )

    # NOTE: output last dim = d; if d < 128 this path pays masked stores.
    out = pl.pallas_call(
        functools.partial(_ln_kernel, eps=eps),
        out_shape=jax.ShapeDtypeStruct((n_pad, d), x.dtype),
        grid=(n_pad // tm,),
        in_specs=[
            pl.BlockSpec((tm, d), lambda i: (i, 0)),
            pl.BlockSpec((1, d), lambda i: (0, 0)),
            pl.BlockSpec((1, d), lambda i: (0, 0)),
        ],
        out_specs=pl.BlockSpec((tm, d), lambda i: (i, 0)),
        compiler_params=pltpu.CompilerParams(
            dimension_semantics=("parallel",),
            vmem_limit_bytes=vmem_limit,
        ),
        cost_estimate=cost,
    )(x2, gamma2, beta2)
    if n_pad != n_tok:
        out = out[:n_tok]
    return out.reshape(orig_shape)


def prenorm_linear_pallas(x, gamma, beta, w, b=None, *, eps=1e-5, tm=256):
    """out = LayerNorm(x) @ w (+ b), fused in one Pallas kernel."""
    orig_shape = x.shape
    d = orig_shape[-1]
    e = w.shape[-1]

    x2 = x.reshape(-1, d)
    n_tok = x2.shape[0]
    tm = _pick_tile(n_tok, tm)
    n_pad = _round_up(n_tok, tm)
    if n_pad != n_tok:
        x2 = jnp.pad(x2, ((0, n_pad - n_tok), (0, 0)))

    gamma2 = gamma.astype(jnp.float32).reshape(1, d)
    beta2 = beta.astype(jnp.float32).reshape(1, d)
    w2 = w.astype(jnp.float32).reshape(d, e)
    b2 = (jnp.zeros((e,), jnp.float32) if b is None else b.astype(jnp.float32))
    b2 = b2.reshape(1, e)

    # VMEM budget: double-buffered x tile + out tile, resident weights/affine.
    vmem_bytes = 4 * (2 * tm * d + 2 * tm * e + d * e + 2 * d + e) + (1 << 20)
    vmem_limit = int(min(64 * 1024 * 1024, max(vmem_bytes, 16 * 1024 * 1024)))
    cost = pl.CostEstimate(
        flops=int(7 * n_pad * d + 2 * n_pad * d * e),
        transcendentals=int(n_pad),
        bytes_accessed=int(4 * (n_pad * d + n_pad * e + d * e + 2 * d + e)),
    )

    out = pl.pallas_call(
        functools.partial(_ln_linear_kernel, eps=eps),
        out_shape=jax.ShapeDtypeStruct((n_pad, e), x.dtype),
        grid=(n_pad // tm,),
        in_specs=[
            # If DMA stays exposed at very large tm, add
            # pipeline_mode=pl.Buffered(3) on this x spec (costs one extra
            # tm*d*4B VMEM buffer; watch v7x's 64 MiB VMEM).
            pl.BlockSpec((tm, d), lambda i: (i, 0)),
            pl.BlockSpec((1, d), lambda i: (0, 0)),
            pl.BlockSpec((1, d), lambda i: (0, 0)),
            pl.BlockSpec((d, e), lambda i: (0, 0)),   # weights resident in VMEM
            pl.BlockSpec((1, e), lambda i: (0, 0)),
        ],
        out_specs=pl.BlockSpec((tm, e), lambda i: (i, 0)),
        compiler_params=pltpu.CompilerParams(
            dimension_semantics=("parallel",),
            vmem_limit_bytes=vmem_limit,
        ),
        cost_estimate=cost,
    )(x2, gamma2, beta2, w2, b2)

    if n_pad != n_tok:
        out = out[:n_tok]
    return out.reshape(orig_shape[:-1] + (e,))


# -----------------------------------------------------------------------------
# Module-level wrapper: PreNorm(dim, fn): x -> fn(LayerNorm(x), ...)
# -----------------------------------------------------------------------------
class FusedLinear:
    """A wrapped fn of the form y -> y @ w (+ b) that can be fused into the
    LayerNorm kernel epilogue (e.g. the first 1x1 projection of FeedForward)."""

    def __init__(self, w, b=None):
        self.w = jnp.asarray(w)
        self.b = None if b is None else jnp.asarray(b)

    def __call__(self, y):  # plain-JAX fallback / reference path
        out = jnp.dot(y, self.w, preferred_element_type=jnp.float32)
        if self.b is not None:
            out = out + self.b
        return out.astype(y.dtype)


class PreNormPallas:
    """JAX/Pallas port of PreNorm: x -> fn(LayerNorm(x), *args, **kwargs)."""

    def __init__(self, dim, fn, eps=1e-5):
        self.dim = dim
        self.fn = fn
        self.eps = eps
        # nn.LayerNorm(dim) default init: weight = ones, bias = zeros (f32)
        self.gamma = jnp.ones((dim,), jnp.float32)
        self.beta = jnp.zeros((dim,), jnp.float32)

    def __call__(self, x, *args, **kwargs):
        if isinstance(self.fn, FusedLinear) and not args and not kwargs:
            return prenorm_linear_pallas(
                x, self.gamma, self.beta, self.fn.w, self.fn.b, eps=self.eps
            )
        # TODO(synk): non-linear wrapped fns (e.g. FeedForward's depthwise 3x3
        # conv path) run as plain JAX after the LN kernel; the spatial conv has
        # no clean single-kernel fusion with this token-major LayerNorm tile.
        y = layernorm_pallas(x, self.gamma, self.beta, eps=self.eps)
        return self.fn(y, *args, **kwargs)


if __name__ == "__main__":
    key = jax.random.PRNGKey(0)
    # Token-major [b, h, w, c] as fed to PreNorm(FeedForward) inside HRFT.
    B, H, W, D = 2, 16, 16, 32
    E = 4 * D  # FeedForward expansion (dim*4) -> 128 lanes: lane-dense stores

    kx, kw, kb = jax.random.split(key, 3)
    x = jax.random.normal(kx, (B, H, W, D), jnp.float32)
    w = jax.random.normal(kw, (D, E), jnp.float32) * 0.02
    b = jax.random.normal(kb, (E,), jnp.float32) * 0.02

    prenorm = PreNormPallas(D, FusedLinear(w, b))
    out = prenorm(x)
    jax.block_until_ready(out)

    # Plain-JAX reference (biased variance + eps inside rsqrt, like nn.LayerNorm)
    mean = jnp.mean(x, axis=-1, keepdims=True)
    var = jnp.mean((x - mean) ** 2, axis=-1, keepdims=True)
    y_ref = (x - mean) * jax.lax.rsqrt(var + 1e-5)
    y_ref = y_ref * prenorm.gamma + prenorm.beta
    out_ref = jnp.einsum("bhwd,de->bhwe", y_ref, w) + b

    assert out.shape == out_ref.shape
    assert jnp.allclose(out, out_ref, atol=1e-4, rtol=1e-4), "fused prenorm mismatch"

    # Also exercise the LN-only path (arbitrary wrapped fn).
    y_ln = layernorm_pallas(x, prenorm.gamma, prenorm.beta)
    jax.block_until_ready(y_ln)
    assert jnp.allclose(y_ln, y_ref, atol=1e-5, rtol=1e-5), "layernorm mismatch"

    print("KERNEL_OK")
</pallas_src>

<mosaic_0001>
module attributes {stable_mosaic.version = 11 : i64} {
  func.func @_ln_linear_kernel(%arg0: i32, %arg1: memref<64x32xf32, #tpu.memory_space<vmem>>, %arg2: memref<1x32xf32, #tpu.memory_space<vmem>>, %arg3: memref<1x32xf32, #tpu.memory_space<vmem>>, %arg4: memref<32x128xf32, #tpu.memory_space<vmem>>, %arg5: memref<1x128xf32, #tpu.memory_space<vmem>>, %arg6: memref<64x128xf32, #tpu.memory_space<vmem>>) attributes {dimension_semantics = [#tpu.dimension_semantics<parallel>], iteration_bounds = array<i64: 8>, scalar_prefetch = 0 : i64, scratch_operands = 0 : i64, tpu.core_type = #tpu.core_type<tc>, window_params = [{transform_indices = @transform_0, window_bounds = array<i64: 64, 32>}, {pipeline_mode = #tpu.pipeline_mode<synchronous>, transform_indices = @transform_1, window_bounds = array<i64: 1, 32>}, {pipeline_mode = #tpu.pipeline_mode<synchronous>, transform_indices = @transform_2, window_bounds = array<i64: 1, 32>}, {pipeline_mode = #tpu.pipeline_mode<synchronous>, transform_indices = @transform_3, window_bounds = array<i64: 32, 128>}, {pipeline_mode = #tpu.pipeline_mode<synchronous>, transform_indices = @transform_4, window_bounds = array<i64: 1, 128>}, {transform_indices = @transform_5, window_bounds = array<i64: 64, 128>}]} {
    %c0 = arith.constant 0 : index
    %c0_0 = arith.constant 0 : index
    %0 = vector.load %arg1[%c0, %c0_0] : memref<64x32xf32, #tpu.memory_space<vmem>>, vector<64x32xf32>
    %cst = arith.constant dense<0.000000e+00> : vector<64xf32>
    %1 = vector.multi_reduction <add>, %0, %cst [1] : vector<64x32xf32> to vector<64xf32>
    %2 = vector.shape_cast %1 : vector<64xf32> to vector<64x1xf32>
    %cst_1 = arith.constant 3.200000e+01 : f32
    %3 = vector.broadcast %cst_1 : f32 to vector<64x1xf32>
    %4 = arith.divf %2, %3 : vector<64x1xf32>
    %5 = vector.broadcast %4 : vector<64x1xf32> to vector<64x32xf32>
    %6 = arith.subf %0, %5 : vector<64x32xf32>
    %7 = arith.mulf %6, %6 : vector<64x32xf32>
    %cst_2 = arith.constant dense<0.000000e+00> : vector<64xf32>
    %8 = vector.multi_reduction <add>, %7, %cst_2 [1] : vector<64x32xf32> to vector<64xf32>
    %9 = vector.shape_cast %8 : vector<64xf32> to vector<64x1xf32>
    %cst_3 = arith.constant 3.200000e+01 : f32
    %10 = vector.broadcast %cst_3 : f32 to vector<64x1xf32>
    %11 = arith.divf %9, %10 : vector<64x1xf32>
    %cst_4 = arith.constant 9.99999974E-6 : f32
    %12 = vector.broadcast %cst_4 : f32 to vector<64x1xf32>
    %13 = arith.addf %11, %12 : vector<64x1xf32>
    %14 = math.rsqrt %13 : vector<64x1xf32>
    %15 = vector.broadcast %14 : vector<64x1xf32> to vector<64x32xf32>
    %16 = arith.mulf %6, %15 : vector<64x32xf32>
    %c0_5 = arith.constant 0 : index
    %c0_6 = arith.constant 0 : index
    %17 = vector.load %arg2[%c0_5, %c0_6] : memref<1x32xf32, #tpu.memory_space<vmem>>, vector<1x32xf32>
    %18 = vector.broadcast %17 : vector<1x32xf32> to vector<64x32xf32>
    %19 = arith.mulf %16, %18 : vector<64x32xf32>
    %c0_7 = arith.constant 0 : index
    %c0_8 = arith.constant 0 : index
    %20 = vector.load %arg3[%c0_7, %c0_8] : memref<1x32xf32, #tpu.memory_space<vmem>>, vector<1x32xf32>
    %21 = vector.broadcast %20 : vector<1x32xf32> to vector<64x32xf32>
    %22 = arith.addf %19, %21 : vector<64x32xf32>
    %c0_9 = arith.constant 0 : index
    %c0_10 = arith.constant 0 : index
    %23 = vector.load %arg4[%c0_9, %c0_10] : memref<32x128xf32, #tpu.memory_space<vmem>>, vector<32x128xf32>
    %cst_11 = arith.constant dense<0.000000e+00> : vector<64x128xf32>
    %24 = tpu.matmul %22, %23, %cst_11 {dimension_numbers = #tpu.dot_dimension_numbers<[1], [0], [0], [1], [0, 0, 1, 1], [], []>} : vector<64x32xf32>, vector<32x128xf32>, vector<64x128xf32> -> vector<64x128xf32>
    %c0_12 = arith.constant 0 : index
    %c0_13 = arith.constant 0 : index
    %25 = vector.load %arg5[%c0_12, %c0_13] : memref<1x128xf32, #tpu.memory_space<vmem>>, vector<1x128xf32>
    %26 = vector.broadcast %25 : vector<1x128xf32> to vector<64x128xf32>
    %27 = arith.addf %24, %26 : vector<64x128xf32>
    %c0_14 = arith.constant 0 : index
    %c0_15 = arith.constant 0 : index
    %28 = vector.load %arg6[%c0_14, %c0_15] : memref<64x128xf32, #tpu.memory_space<vmem>>, vector<64x128xf32>
    tpu.vector_store %arg6[%c0_14, %c0_15], %27 {strides = array<i32>} : memref<64x128xf32, #tpu.memory_space<vmem>>, vector<64x128xf32>,
    return
  }
  func.func @transform_0(%arg0: i32) -> (i32, i32) {
    %c0_i32 = arith.constant 0 : i32
    %c0_i32_0 = arith.constant 0 : i32
    return %arg0, %c0_i32 : i32, i32
  }
  func.func @transform_1(%arg0: i32) -> (i32, i32) {
    %c0_i32 = arith.constant 0 : i32
    %c0_i32_0 = arith.constant 0 : i32
    %c0_i32_1 = arith.constant 0 : i32
    return %c0_i32, %c0_i32_0 : i32, i32
  }
  func.func @transform_2(%arg0: i32) -> (i32, i32) {
    %c0_i32 = arith.constant 0 : i32
    %c0_i32_0 = arith.constant 0 : i32
    %c0_i32_1 = arith.constant 0 : i32
    return %c0_i32, %c0_i32_0 : i32, i32
  }
  func.func @transform_3(%arg0: i32) -> (i32, i32) {
    %c0_i32 = arith.constant 0 : i32
    %c0_i32_0 = arith.constant 0 : i32
    %c0_i32_1 = arith.constant 0 : i32
    return %c0_i32, %c0_i32_0 : i32, i32
  }
  func.func @transform_4(%arg0: i32) -> (i32, i32) {
    %c0_i32 = arith.constant 0 : i32
    %c0_i32_0 = arith.constant 0 : i32
    %c0_i32_1 = arith.constant 0 : i32
    return %c0_i32, %c0_i32_0 : i32, i32
  }
  func.func @transform_5(%arg0: i32) -> (i32, i32) {
    %c0_i32 = arith.constant 0 : i32
    %c0_i32_0 = arith.constant 0 : i32
    return %arg0, %c0_i32 : i32, i32
  }
}

</mosaic_0001>

<llo_original>
// kernel: tpu_custom_call.1
$region0: #{tpu_custom_call.1}
  #allocation0 [shape = 'u32[]', space=smem, size = 0x4, offset = 0x4, fixed_abs, tag = 'smem constant byte address 0x4 - core index']
  #allocation1 [shape = 'u32[72,128]{1,0:T(1,128)}', space=vmem, size = 0x9000, scoped, tag = 'internal scratch']
  %s0 = inlined_call_operand.vmem [shape: f32[512,32], index: 0, kind: input, shape index: {}]
  %s1 = inlined_call_operand.vmem [shape: f32[1,32], index: 1, kind: input, shape index: {}]
  %s2 = inlined_call_operand.vmem [shape: f32[1,32], index: 2, kind: input, shape index: {}]
  %s3 = inlined_call_operand.vmem [shape: f32[32,128], index: 3, kind: input, shape index: {}]
  %s4 = inlined_call_operand.vmem [shape: f32[1,128], index: 4, kind: input, shape index: {}]
  %s5 = inlined_call_operand.hbm [shape: f32[512,128], index: 5, kind: output, shape index: {}]
  %s6 = sld [smem:[#allocation0]]
  $region53: #{tpu_custom_call.1} parent=0
    _
  %s8 = ssub.s32 1, %s6
  %s9 = scalar_select 0, %s8, %s6
  $region1: #{tpu_custom_call.1} parent=0
    #allocation2 [shape = 'u8[65536]{0}', space=vmem, size = 0x10000, scoped, tag = 'output window, operand 0']
    #allocation3 [shape = 's32[2]{0}', space=sflag, size = 0x8, scoped, tag = 'scoped memory for tpu_custom_call.1']
    %10 = vsyncpa [#allocation3], 0
    %s11 = scalar_lea.sflag [#allocation3], 1
    %12 = vsyncpa %s11, 0
    loop: start=0, step=1, limit=10
    $region2: #{tpu_custom_call.1} parent=1 // loop_pre_header
      _
    $region3: #{tpu_custom_call.1} parent=1 // loop_header
      %s14 = sphi 0, %s18
      %p15 = scmp.ge.s32.totalorder %s14, 10
      %s24 = sphi 0, %s26
      %s27 = sphi 0, %s24
      %s28 = sphi 0, %s27
      %s44 = sphi 0, %s28
      %s48 = sphi 0, %s48
      %s50 = sphi 0, %s48
      %s51 = sphi 0, %s50
      %s65 = sphi 0, %s51
      %s69 = sphi 0, %s69
      %s71 = sphi 0, %s69
      %s72 = sphi 0, %s71
      %s86 = sphi 0, %s72
      %s90 = sphi 0, %s90
      %s92 = sphi 0, %s90
      %s93 = sphi 0, %s92
      %s107 = sphi 0, %s93
      %s111 = sphi 0, %s111
      %s113 = sphi 0, %s111
      %s114 = sphi 0, %s113
      %s128 = sphi 0, %s114
      %s134 = sphi 0, %s136
      %s137 = sphi 0, %s134
      %s138 = sphi 0, %s137
      %s154 = sphi 0, %s138
    $region4: #{tpu_custom_call.1} parent=1 // loop_header_branch
      %17 = sbr.rel (%p15) target = $region8
    $region5: #{tpu_custom_call.1} parent=1 // loop_body
      %s19 = ssub.s32 %s14, 1
      %s20 = ssub.s32 %s14, 2
      %s21 = sadd.s32 %s14, 1
      %s22 = ssub.s32 %s14, %s21
      %p23 = scmp.eq.s32.totalorder %s22, 0
      %s25 = sadd.s32 %s24, 1
      %s26 = scalar_select %p23, %s24, %s25
      %p29 = pneg %p23
      %p30 = scmp.eq.s32.totalorder %s14, 7
      %p31 = por %p29, %p30
      %p32 = scmp.ne.s32.totalorder %s24, %s27
      %p33 = scmp.eq.s32.totalorder %s14, 0
      %p34 = por %p32, %p33
      %p35 = scmp.ne.s32.totalorder %s24, %s27
      %p36 = scmp.eq.s32.totalorder %s19, 7
      %p37 = por %p35, %p36
      %p38 = scmp.ne.s32.totalorder %s27, %s28
      %p39 = scmp.eq.s32.totalorder %s19, 0
      %p40 = por %p38, %p39
      %p41 = scmp.ne.s32.totalorder %s27, %s28
      %p42 = scmp.eq.s32.totalorder %s20, 7
      %p43 = por %p41, %p42
      %p45 = scmp.ne.s32.totalorder %s28, %s44
      %p46 = scmp.eq.s32.totalorder %s20, 0
      %p47 = por %p45, %p46
      %s49 = sadd.s32 %s48, 1
      %p52 = scmp.eq.s32.totalorder %s14, 7
      %p53 = scmp.ne.s32.totalorder %s48, %s50
      %p54 = scmp.eq.s32.totalorder %s14, 0
      %p55 = por %p53, %p54
      %p56 = scmp.ne.s32.totalorder %s48, %s50
      %p57 = scmp.eq.s32.totalorder %s19, 7
      %p58 = por %p56, %p57
      %p59 = scmp.ne.s32.totalorder %s50, %s51
      %p60 = scmp.eq.s32.totalorder %s19, 0
      %p61 = por %p59, %p60
      %p62 = scmp.ne.s32.totalorder %s50, %s51
      %p63 = scmp.eq.s32.totalorder %s20, 7
      %p64 = por %p62, %p63
      %p66 = scmp.ne.s32.totalorder %s51, %s65
      %p67 = scmp.eq.s32.totalorder %s20, 0
      %p68 = por %p66, %p67
      %s70 = sadd.s32 %s69, 1
      %p73 = scmp.eq.s32.totalorder %s14, 7
      %p74 = scmp.ne.s32.totalorder %s69, %s71
      %p75 = scmp.eq.s32.totalorder %s14, 0
      %p76 = por %p74, %p75
      %p77 = scmp.ne.s32.totalorder %s69, %s71
      %p78 = scmp.eq.s32.totalorder %s19, 7
      %p79 = por %p77, %p78
      %p80 = scmp.ne.s32.totalorder %s71, %s72
      %p81 = scmp.eq.s32.totalorder %s19, 0
      %p82 = por %p80, %p81
      %p83 = scmp.ne.s32.totalorder %s71, %s72
      %p84 = scmp.eq.s32.totalorder %s20, 7
      %p85 = por %p83, %p84
      %p87 = scmp.ne.s32.totalorder %s72, %s86
      %p88 = scmp.eq.s32.totalorder %s20, 0
      %p89 = por %p87, %p88
      %s91 = sadd.s32 %s90, 1
      %p94 = scmp.eq.s32.totalorder %s14, 7
      %p95 = scmp.ne.s32.totalorder %s90, %s92
      %p96 = scmp.eq.s32.totalorder %s14, 0
      %p97 = por %p95, %p96
      %p98 = scmp.ne.s32.totalorder %s90, %s92
      %p99 = scmp.eq.s32.totalorder %s19, 7
      %p100 = por %p98, %p99
      %p101 = scmp.ne.s32.totalorder %s92, %s93
      %p102 = scmp.eq.s32.totalorder %s19, 0
      %p103 = por %p101, %p102
      %p104 = scmp.ne.s32.totalorder %s92, %s93
      %p105 = scmp.eq.s32.totalorder %s20, 7
      %p106 = por %p104, %p105
      %p108 = scmp.ne.s32.totalorder %s93, %s107
      %p109 = scmp.eq.s32.totalorder %s20, 0
      %p110 = por %p108, %p109
      %s112 = sadd.s32 %s111, 1
      %p115 = scmp.eq.s32.totalorder %s14, 7
      %p116 = scmp.ne.s32.totalorder %s111, %s113
      %p117 = scmp.eq.s32.totalorder %s14, 0
      %p118 = por %p116, %p117
      %p119 = scmp.ne.s32.totalorder %s111, %s113
      %p120 = scmp.eq.s32.totalorder %s19, 7
      %p121 = por %p119, %p120
      %p122 = scmp.ne.s32.totalorder %s113, %s114
      %p123 = scmp.eq.s32.totalorder %s19, 0
      %p124 = por %p122, %p123
      %p125 = scmp.ne.s32.totalorder %s113, %s114
      %p126 = scmp.eq.s32.totalorder %s20, 7
      %p127 = por %p125, %p126
      %p129 = scmp.ne.s32.totalorder %s114, %s128
      %p130 = scmp.eq.s32.totalorder %s20, 0
      %p131 = por %p129, %p130
      %s132 = ssub.s32 %s14, %s21
      %p133 = scmp.eq.s32.totalorder %s132, 0
      %s135 = sadd.s32 %s134, 1
      %s136 = scalar_select %p133, %s134, %s135
      %p139 = pneg %p133
      %p140 = scmp.eq.s32.totalorder %s14, 7
      %p141 = por %p139, %p140
      %p142 = scmp.ne.s32.totalorder %s134, %s137
      %p143 = scmp.eq.s32.totalorder %s14, 0
      %p144 = por %p142, %p143
      %p145 = scmp.ne.s32.totalorder %s134, %s137
      %p146 = scmp.eq.s32.totalorder %s19, 7
      %p147 = por %p145, %p146
      %p148 = scmp.ne.s32.totalorder %s137, %s138
      %p149 = scmp.eq.s32.totalorder %s19, 0
      %p150 = por %p148, %p149
      %p151 = scmp.ne.s32.totalorder %s137, %s138
      %p152 = scmp.eq.s32.totalorder %s20, 7
      %p153 = por %p151, %p152
      %p155 = scmp.ne.s32.totalorder %s138, %s154
      %p156 = scmp.eq.s32.totalorder %s20, 0
      %p157 = por %p155, %p156
      %p158 = scmp.le.s32.totalorder 1, %s14
      %p159 = scmp.lt.s32.totalorder %s14, 9
      %p160 = pnand %p158, %p159
      %p161 = pneg %p160
      // Predicated region
      $region9: #{tpu_custom_call.1} parent=5 // pred_check
        _
      $region10: #{tpu_custom_call.1} parent=5 // pred_check_branch
        %163 = sbr.rel (%p160) target = $region12
      $region11: #{tpu_custom_call.1} parent=5 // pred_region
        %s164 = ssub.s32 %s14, 1
        // Predicated region
        $region13: #{tpu_custom_call.1} parent=11 // pred_check
          %p165 = pneg %p61
        $region14: #{tpu_custom_call.1} parent=11 // pred_check_branch
          %167 = sbr.rel (%p165) target = $region16
        $region15: #{tpu_custom_call.1} parent=11 // pred_region
          _
        $region16: #{tpu_custom_call.1} parent=11 // pred_fallthru
          _
        // Predicated region
        $region17: #{tpu_custom_call.1} parent=11 // pred_check
          %p168 = pneg %p82
        $region18: #{tpu_custom_call.1} parent=11 // pred_check_branch
          %170 = sbr.rel (%p168) target = $region20
        $region19: #{tpu_custom_call.1} parent=11 // pred_region
          _
        $region20: #{tpu_custom_call.1} parent=11 // pred_fallthru
          _
        // Predicated region
        $region21: #{tpu_custom_call.1} parent=11 // pred_check
          %p171 = pneg %p103
        $region22: #{tpu_custom_call.1} parent=11 // pred_check_branch
          %173 = sbr.rel (%p171) target = $region24
        $region23: #{tpu_custom_call.1} parent=11 // pred_region
          _
        $region24: #{tpu_custom_call.1} parent=11 // pred_fallthru
          _
        // Predicated region
        $region25: #{tpu_custom_call.1} parent=11 // pred_check
          %p174 = pneg %p124
        $region26: #{tpu_custom_call.1} parent=11 // pred_check_branch
          %176 = sbr.rel (%p174) target = $region28
        $region27: #{tpu_custom_call.1} parent=11 // pred_region
          _
        $region28: #{tpu_custom_call.1} parent=11 // pred_fallthru
          _
      $region12: #{tpu_custom_call.1} parent=5 // pred_fallthru
        _
      %p177 = scmp.lt.s32.totalorder %s14, 8
      // Predicated region
      $region29: #{tpu_custom_call.1} parent=5 // pred_check
        %p178 = pneg %p177
      $region30: #{tpu_custom_call.1} parent=5 // pred_check_branch
        %180 = sbr.rel (%p178) target = $region32
      $region31: #{tpu_custom_call.1} parent=5 // pred_region
        // Predicated region
        $region33: #{tpu_custom_call.1} parent=31 // pred_check
          %p181 = pneg %p34
        $region34: #{tpu_custom_call.1} parent=31 // pred_check_branch
          %183 = sbr.rel (%p181) target = $region36
        $region35: #{tpu_custom_call.1} parent=31 // pred_region
          %s184 = smul.u32 8, %s14
          %p185 = scmp.lt.s32.totalorder %s184, 63
          %s186 = scalar_select %p185, %s184, 63
          %s187 = smul.addr %s186, 8
          %s188 = scalar_lea.vmem %s0, %s187
          %s189 = smul.u32 8, %s14
        $region36: #{tpu_custom_call.1} parent=31 // pred_fallthru
          _
      $region32: #{tpu_custom_call.1} parent=5 // pred_fallthru
        _
      %p190 = scmp.le.s32.totalorder 1, %s14
      %p191 = scmp.lt.s32.totalorder %s14, 9
      %p192 = pnand %p190, %p191
      %p193 = pneg %p192
      // Predicated region
      $region37: #{tpu_custom_call.1} parent=5 // pred_check
        _
      $region38: #{tpu_custom_call.1} parent=5 // pred_check_branch
        %195 = sbr.rel (%p192) target = $region40
      $region39: #{tpu_custom_call.1} parent=5 // pred_region
        %s196 = ssub.s32 %s14, 1
        %s197 = smul.u32 8, %s19
        %p198 = scmp.lt.s32.totalorder %s197, 63
        %s199 = scalar_select %p198, %s197, 63
        %s200 = smul.addr %s199, 8
        %s201 = scalar_lea.vmem %s0, %s200
        %p202 = pneg %p40
        %p203 = pneg %p37
        %p204 = pneg %p61
        %p205 = pneg %p58
        %p206 = pneg %p82
        %p207 = pneg %p79
        %p208 = pneg %p103
        %p209 = pneg %p100
        %p210 = pneg %p124
        %p211 = pneg %p121
        %p212 = pneg %p150
        %p213 = pneg %p147
        %s214 = sand.u32 %s137, 1
        %s215 = scalar_lea.sflag [#allocation3], %s214
        %s216 = sand.u32 %s137, 1
        %s217 = smul.addr %s216, 64
        %s218 = scalar_lea.vmem [#allocation2], %s217
        %s219 = smul.u32 8, %s19
        %p220 = scmp.lt.s32.totalorder %s219, 63
        %s221 = scalar_select %p220, %s219, 63
        %s222 = smul.addr %s221, 8
        %s223 = scalar_lea.vmem %s0, %s222
        %s224 = smul.u32 8, %s19
        %s225 = smul.u32 8, %s19
        %v226 = vld [vmem:[%s223] sm:$0xff]
        %v227 = vld [vmem:[%s223 + $0x8] sm:$0xff]
        %v228 = vld [vmem:[%s223 + $0x10] sm:$0xff]
        %v229 = vld [vmem:[%s223 + $0x18] sm:$0xff]
        %v230 = vld [vmem:[%s223 + $0x20] sm:$0xff]
        %v231 = vld [vmem:[%s223 + $0x28] sm:$0xff]
        %v232 = vld [vmem:[%s223 + $0x30] sm:$0xff]
        %v233 = vld [vmem:[%s223 + $0x38] sm:$0xff]
        %vm234 = vcmask 261120
        %v235 = vsel %vm234, %v226, 0.0
        %236 = vadd.xlane.f32.xlu0 %v235
        %v237 = vpop.xlane.xlu0 %236
        %v238 = vsel %vm234, %v227, 0.0
        %239 = vadd.xlane.f32.xlu0 %v238
        %v240 = vpop.xlane.xlu0 %239
        %v241 = vsel %vm234, %v228, 0.0
        %242 = vadd.xlane.f32.xlu0 %v241
        %v243 = vpop.xlane.xlu0 %242
        %v244 = vsel %vm234, %v229, 0.0
        %245 = vadd.xlane.f32.xlu0 %v244
        %v246 = vpop.xlane.xlu0 %245
        %v247 = vsel %vm234, %v230, 0.0
        %248 = vadd.xlane.f32.xlu0 %v247
        %v249 = vpop.xlane.xlu0 %248
        %v250 = vsel %vm234, %v231, 0.0
        %251 = vadd.xlane.f32.xlu0 %v250
        %v252 = vpop.xlane.xlu0 %251
        %v253 = vsel %vm234, %v232, 0.0
        %254 = vadd.xlane.f32.xlu0 %v253
        %v255 = vpop.xlane.xlu0 %254
        %v256 = vsel %vm234, %v233, 0.0
        %257 = vadd.xlane.f32.xlu0 %v256
        %v258 = vpop.xlane.xlu0 %257
        %v259 = vrcp.pop 32.0
        %v260 = vmul.f32 32.0, %v259
        %v261 = vsub.f32 1.0, %v260
        %v262 = vmul.f32 %v259, %v261
        %v263 = vadd.f32 %v259, %v262
        %vm264 = vweird.f32 %v259
        %v265 = vsel %vm264, %v259, %v263
        %v266 = vmul.f32 %v237, %v265
        %v267 = vmul.f32 %v240, %v265
        %v268 = vmul.f32 %v243, %v265
        %v269 = vmul.f32 %v246, %v265
        %v270 = vmul.f32 %v249, %v265
        %v271 = vmul.f32 %v252, %v265
        %v272 = vmul.f32 %v255, %v265
        %v273 = vmul.f32 %v258, %v265
        %v274 = vsub.f32 %v226, %v266
        %v275 = vsub.f32 %v227, %v267
        %v276 = vsub.f32 %v228, %v268
        %v277 = vsub.f32 %v229, %v269
        %v278 = vsub.f32 %v230, %v270
        %v279 = vsub.f32 %v231, %v271
        %v280 = vsub.f32 %v232, %v272
        %v281 = vsub.f32 %v233, %v273
        %v282 = vmul.f32 %v274, %v274
        %v283 = vmul.f32 %v275, %v275
        %v284 = vmul.f32 %v276, %v276
        %v285 = vmul.f32 %v277, %v277
        %v286 = vmul.f32 %v278, %v278
        %v287 = vmul.f32 %v279, %v279
        %v288 = vmul.f32 %v280, %v280
        %v289 = vmul.f32 %v281, %v281
        %v290 = vsel %vm234, %v282, 0.0
        %291 = vadd.xlane.f32.xlu0 %v290
        %v292 = vpop.xlane.xlu0 %291
        %v293 = vsel %vm234, %v283, 0.0
        %294 = vadd.xlane.f32.xlu0 %v293
        %v295 = vpop.xlane.xlu0 %294
        %v296 = vsel %vm234, %v284, 0.0
        %297 = vadd.xlane.f32.xlu0 %v296
        %v298 = vpop.xlane.xlu0 %297
        %v299 = vsel %vm234, %v285, 0.0
        %300 = vadd.xlane.f32.xlu0 %v299
        %v301 = vpop.xlane.xlu0 %300
        %v302 = vsel %vm234, %v286, 0.0
        %303 = vadd.xlane.f32.xlu0 %v302
        %v304 = vpop.xlane.xlu0 %303
        %v305 = vsel %vm234, %v287, 0.0
        %306 = vadd.xlane.f32.xlu0 %v305
        %v307 = vpop.xlane.xlu0 %306
        %v308 = vsel %vm234, %v288, 0.0
        %309 = vadd.xlane.f32.xlu0 %v308
        %v310 = vpop.xlane.xlu0 %309
        %v311 = vsel %vm234, %v289, 0.0
        %312 = vadd.xlane.f32.xlu0 %v311
        %v313 = vpop.xlane.xlu0 %312
        %v314 = vmul.f32 %v292, %v265
        %v315 = vmul.f32 %v295, %v265
        %v316 = vmul.f32 %v298, %v265
        %v317 = vmul.f32 %v301, %v265
        %v318 = vmul.f32 %v304, %v265
        %v319 = vmul.f32 %v307, %v265
        %v320 = vmul.f32 %v310, %v265
        %v321 = vmul.f32 %v313, %v265
        %v322 = vadd.f32 %v314, 1e-05
        %v323 = vadd.f32 %v315, 1e-05
        %v324 = vadd.f32 %v316, 1e-05
        %v325 = vadd.f32 %v317, 1e-05
        %v326 = vadd.f32 %v318, 1e-05
        %v327 = vadd.f32 %v319, 1e-05
        %v328 = vadd.f32 %v320, 1e-05
        %v329 = vadd.f32 %v321, 1e-05
        %v330 = vrsqrt.pop %v322
        %v331 = vmul.f32 %v330, %v322
        %v332 = vmul.f32 %v331, %v330
        %v333 = vmul.f32 0.5, %v332
        %v334 = vsub.f32 1.5, %v333
        %v335 = vmul.f32 %v330, %v334
        %vm336 = vweird.f32 %v322
        %vm337 = vweird.f32 %v330
        %vm338 = vmor %vm336, %vm337
        %v339 = vsel %vm338, %v330, %v335
        %v340 = vrsqrt.pop %v323
        %v341 = vmul.f32 %v340, %v323
        %v342 = vmul.f32 %v341, %v340
        %v343 = vmul.f32 0.5, %v342
        %v344 = vsub.f32 1.5, %v343
        %v345 = vmul.f32 %v340, %v344
        %vm346 = vweird.f32 %v323
        %vm347 = vweird.f32 %v340
        %vm348 = vmor %vm346, %vm347
        %v349 = vsel %vm348, %v340, %v345
        %v350 = vrsqrt.pop %v324
        %v351 = vmul.f32 %v350, %v324
        %v352 = vmul.f32 %v351, %v350
        %v353 = vmul.f32 0.5, %v352
        %v354 = vsub.f32 1.5, %v353
        %v355 = vmul.f32 %v350, %v354
        %vm356 = vweird.f32 %v324
        %vm357 = vweird.f32 %v350
        %vm358 = vmor %vm356, %vm357
        %v359 = vsel %vm358, %v350, %v355
        %v360 = vrsqrt.pop %v325
        %v361 = vmul.f32 %v360, %v325
        %v362 = vmul.f32 %v361, %v360
        %v363 = vmul.f32 0.5, %v362
        %v364 = vsub.f32 1.5, %v363
        %v365 = vmul.f32 %v360, %v364
        %vm366 = vweird.f32 %v325
        %vm367 = vweird.f32 %v360
        %vm368 = vmor %vm366, %vm367
        %v369 = vsel %vm368, %v360, %v365
        %v370 = vrsqrt.pop %v326
        %v371 = vmul.f32 %v370, %v326
        %v372 = vmul.f32 %v371, %v370
        %v373 = vmul.f32 0.5, %v372
        %v374 = vsub.f32 1.5, %v373
        %v375 = vmul.f32 %v370, %v374
        %vm376 = vweird.f32 %v326
        %vm377 = vweird.f32 %v370
        %vm378 = vmor %vm376, %vm377
        %v379 = vsel %vm378, %v370, %v375
        %v380 = vrsqrt.pop %v327
        %v381 = vmul.f32 %v380, %v327
        %v382 = vmul.f32 %v381, %v380
        %v383 = vmul.f32 0.5, %v382
        %v384 = vsub.f32 1.5, %v383
        %v385 = vmul.f32 %v380, %v384
        %vm386 = vweird.f32 %v327
        %vm387 = vweird.f32 %v380
        %vm388 = vmor %vm386, %vm387
        %v389 = vsel %vm388, %v380, %v385
        %v390 = vrsqrt.pop %v328
        %v391 = vmul.f32 %v390, %v328
        %v392 = vmul.f32 %v391, %v390
        %v393 = vmul.f32 0.5, %v392
        %v394 = vsub.f32 1.5, %v393
        %v395 = vmul.f32 %v390, %v394
        %vm396 = vweird.f32 %v328
        %vm397 = vweird.f32 %v390
        %vm398 = vmor %vm396, %vm397
        %v399 = vsel %vm398, %v390, %v395
        %v400 = vrsqrt.pop %v329
        %v401 = vmul.f32 %v400, %v329
        %v402 = vmul.f32 %v401, %v400
        %v403 = vmul.f32 0.5, %v402
        %v404 = vsub.f32 1.5, %v403
        %v405 = vmul.f32 %v400, %v404
        %vm406 = vweird.f32 %v329
        %vm407 = vweird.f32 %v400
        %vm408 = vmor %vm406, %vm407
        %v409 = vsel %vm408, %v400, %v405
        %v410 = vmul.f32 %v274, %v339
        %v411 = vmul.f32 %v275, %v349
        %v412 = vmul.f32 %v276, %v359
        %v413 = vmul.f32 %v277, %v369
        %v414 = vmul.f32 %v278, %v379
        %v415 = vmul.f32 %v279, %v389
        %v416 = vmul.f32 %v280, %v399
        %v417 = vmul.f32 %v281, %v409
        %v418 = vld [vmem:[%s1] sm:$0x1]
        %v420 = vperm.slane %v418, 0
        %v422 = vmul.f32 %v410, %v420
        %v423 = vmul.f32 %v411, %v420
        %v424 = vmul.f32 %v412, %v420
        %v425 = vmul.f32 %v413, %v420
        %v426 = vmul.f32 %v414, %v420
        %v427 = vmul.f32 %v415, %v420
        %v428 = vmul.f32 %v416, %v420
        %v429 = vmul.f32 %v417, %v420
        %v430 = vld [vmem:[%s2] sm:$0x1]
        %v432 = vperm.slane %v430, 0
        %v434 = vadd.f32 %v422, %v432
        %v435 = vadd.f32 %v423, %v432
        %v436 = vadd.f32 %v424, %v432
        %v437 = vadd.f32 %v425, %v432
        %v438 = vadd.f32 %v426, %v432
        %v439 = vadd.f32 %v427, %v432
        %v440 = vadd.f32 %v428, %v432
        %v441 = vadd.f32 %v429, %v432
        %v442 = vld [vmem:[%s3] sm:$0xff]
        %v443 = vld [vmem:[%s3 + $0x8] sm:$0xff]
        %v444 = vld [vmem:[%s3 + $0x10] sm:$0xff]
        %v445 = vld [vmem:[%s3 + $0x18] sm:$0xff]
        %v446 = vld [vmem:[%s4] sm:$0x1]
        %v448 = vperm.slane %v446, 0
        %v451 = vsel %vm234, %v434, 0
        %v454 = vsel %vm234, %v435, 0
        %v457 = vsel %vm234, %v436, 0
        %v460 = vsel %vm234, %v437, 0
        %v463 = vsel %vm234, %v438, 0
        %v466 = vsel %vm234, %v439, 0
        %v469 = vsel %vm234, %v440, 0
        %v472 = vsel %vm234, %v441, 0
        %474 = vmatpush.msra.mxu0 0.0
        %475 = vmatpush.msra.mxu0 0.0
        %476 = vmatpush.msra.mxu0 0.0
        %477 = vmatpush.msra.mxu0 0.0
        %478 = vmatpush.msra.mxu0 0.0
        %479 = vmatpush.msra.mxu0 0.0
        %480 = vmatpush.msra.mxu0 0.0
        %481 = vmatpush.msra.mxu0 0.0
        %482 = vmatpush.msra.mxu0 0.0
        %483 = vmatpush.msra.mxu0 0.0
        %484 = vmatpush.msra.mxu0 0.0
        %485 = vmatpush.msra.mxu0 0.0
        %486 = vmatpush.msra.mxu0 %v445
        %487 = vmatpush.msra.mxu0 %v444
        %488 = vmatpush.msra.mxu0 %v443
        %489 = vmatpush.msra.mxu0 %v442
        %490 = vmatmul.f32.gmra.mxu0 %v451
        %v491 = vpop.f32.mrf.mxu0
        %v492 = vadd.f32 %v448, %v491
        %493 = vmatmul.f32.gmra.mxu0 %v454
        %v494 = vpop.f32.mrf.mxu0
        %v495 = vadd.f32 %v448, %v494
        %496 = vmatmul.f32.gmra.mxu0 %v457
        %v497 = vpop.f32.mrf.mxu0
        %v498 = vadd.f32 %v448, %v497
        %499 = vmatmul.f32.gmra.mxu0 %v460
        %v500 = vpop.f32.mrf.mxu0
        %v501 = vadd.f32 %v448, %v500
        %502 = vmatmul.f32.gmra.mxu0 %v463
        %v503 = vpop.f32.mrf.mxu0
        %v504 = vadd.f32 %v448, %v503
        %505 = vmatmul.f32.gmra.mxu0 %v466
        %v506 = vpop.f32.mrf.mxu0
        %v507 = vadd.f32 %v448, %v506
        %508 = vmatmul.f32.gmra.mxu0 %v469
        %v509 = vpop.f32.mrf.mxu0
        %v510 = vadd.f32 %v448, %v509
        %511 = vmatmul.f32.gmra.mxu0 %v472
        %v512 = vpop.f32.mrf.mxu0
        %v513 = vadd.f32 %v448, %v512
        %514 = vdwg.mxu0
        %515 = vst [vmem:[%s218] sm:$0xff] %v492
        %516 = vst [vmem:[%s218 + $0x8] sm:$0xff] %v495
        %517 = vst [vmem:[%s218 + $0x10] sm:$0xff] %v498
        %518 = vst [vmem:[%s218 + $0x18] sm:$0xff] %v501
        %519 = vst [vmem:[%s218 + $0x20] sm:$0xff] %v504
        %520 = vst [vmem:[%s218 + $0x28] sm:$0xff] %v507
        %521 = vst [vmem:[%s218 + $0x30] sm:$0xff] %v510
        %522 = vst [vmem:[%s218 + $0x38] sm:$0xff] %v513
        %s523 = sand.u32 %s137, 1
        %s524 = scalar_lea.sflag [#allocation3], %s523
        %s525 = sand.u32 %s137, 1
        %s526 = smul.addr %s525, 64
        %s527 = scalar_lea.vmem [#allocation2], %s526
        // Predicated region
        $region41: #{tpu_custom_call.1} parent=39 // pred_check
          %p528 = pneg %p147
        $region42: #{tpu_custom_call.1} parent=39 // pred_check_branch
          %530 = sbr.rel (%p528) target = $region44
        $region43: #{tpu_custom_call.1} parent=39 // pred_region
          %s531 = smul.u32 8, %s19
          %533 = vsyncadd %s524, 0
          %s534 = smul.addr %s531, 8
          %s535 = scalar_lea.hbm %s5, %s534
          %s536 = sshll.u32 %s527, 4
          %s537 = int_to_ptr.vmem [resolvable:$true] %s536
          %s538 = sshll.u32 %s535, 4
          %s539 = int_to_ptr.hbm [resolvable:$true] %s538
          %544 = dma.vmem_to_hbm [thread:$0]  %s537, 1024, %s539, %s524, 128, 128, 8
        $region44: #{tpu_custom_call.1} parent=39 // pred_fallthru
          _
      $region40: #{tpu_custom_call.1} parent=5 // pred_fallthru
        _
      %p545 = scmp.le.s32.totalorder 2, %s14
      // Predicated region
      $region45: #{tpu_custom_call.1} parent=5 // pred_check
        %p546 = pneg %p545
      $region46: #{tpu_custom_call.1} parent=5 // pred_check_branch
        %548 = sbr.rel (%p546) target = $region48
      $region47: #{tpu_custom_call.1} parent=5 // pred_region
        %s549 = ssub.s32 %s14, 2
        // Predicated region
        $region49: #{tpu_custom_call.1} parent=47 // pred_check
          %p550 = pneg %p153
        $region50: #{tpu_custom_call.1} parent=47 // pred_check_branch
          %552 = sbr.rel (%p550) target = $region52
        $region51: #{tpu_custom_call.1} parent=47 // pred_region
          %s553 = sand.u32 %s138, 1
          %s554 = scalar_lea.sflag [#allocation3], %s553
          %s555 = sand.u32 %s138, 1
          %s556 = smul.addr %s555, 64
          %s557 = scalar_lea.vmem [#allocation2], %s556
          %559 = dma.done %s554, 1024
        $region52: #{tpu_custom_call.1} parent=47 // pred_fallthru
          _
      $region48: #{tpu_custom_call.1} parent=5 // pred_fallthru
        _
    $region6: #{tpu_custom_call.1} parent=1 // loop_footer
      %s18 = sadd.s32 1, %s14
    $region7: #{tpu_custom_call.1} parent=1 // loop_footer_branch
      %13 = sbr.rel target = $region3
    $region8: #{tpu_custom_call.1} parent=1 // loop_exit
      _
    %560 = vsyncpa [#allocation3], 1
    %s561 = scalar_lea.sflag [#allocation3], 1
    %562 = vsyncpa %s561, 1

</llo_original>
